<compile_context>
chip_gen: v5e
topology: v5e:2x2
jax: 0.10.0
libtpu: 0.0.40
codegen_flags: <defaults>
</compile_context>

<pallas_src>
import math

import jax
import jax.numpy as jnp
from jax.experimental import pallas as pl
from jax.experimental.pallas import tpu as pltpu


def _outconv_kernel(x_ref, w_ref, b_ref, o_ref, acc_ref):
    # x_ref: (Cin, tm)   w_ref: (Cout, Cin)   b_ref: (Cout, 1)
    # o_ref: (Cout, tm)  acc_ref: (Cout, tm) f32 scratch
    kk = pl.program_id(2)

    @pl.when(kk == 0)
    def _init():
        acc_ref[...] = jnp.zeros_like(acc_ref)

    acc_ref[...] += jnp.dot(
        w_ref[...], x_ref[...], preferred_element_type=jnp.float32
    )

    @pl.when(kk == pl.num_programs(2) - 1)
    def _finalize():
        o_ref[...] = (acc_ref[...] + b_ref[...]).astype(o_ref.dtype)


def _choose_tm(M, Cin, Cout, *, bytes_per_el=4, vmem_budget=20 << 20):
    """Largest lane-tile (multiple of 128) that keeps double-buffered x/out tiles
    plus the f32 accumulator inside a conservative VMEM budget (v7x-safe)."""
    per_col = (2 * Cin + 3 * Cout) * bytes_per_el  # x dbl-buf + out dbl-buf + acc
    tm = max(128, (vmem_budget // per_col) // 128 * 128)
    tm = min(tm, 2048)
    m_ceil = pl.cdiv(M, 128) * 128
    return min(tm, m_ceil)


def _conv_matmul(x_stack, w_stack, b_col, *, tm=None, out_dtype=None):
    """x_stack: (KK, N, Cin, M), w_stack: (KK, Cout, Cin), b_col: (Cout, 1).
    Returns (N, Cout, M) = sum_kk w_stack[kk] @ x_stack[kk] + b_col."""
    KK, N, Cin, M = x_stack.shape
    Cout = w_stack.shape[1]
    out_dtype = out_dtype or x_stack.dtype

    if tm is None:
        tm = _choose_tm(M, Cin, Cout)
    M_pad = pl.cdiv(M, tm) * tm
    if M_pad != M:
        x_stack = jnp.pad(x_stack, ((0, 0), (0, 0), (0, 0), (0, M_pad - M)))

    grid = (N, M_pad // tm, KK)  # reduction (KK) axis last

    out = pl.pallas_call(
        _outconv_kernel,
        out_shape=jax.ShapeDtypeStruct((N, Cout, M_pad), out_dtype),
        grid_spec=pltpu.PrefetchScalarGridSpec(
            num_scalar_prefetch=0,
            grid=grid,
            in_specs=[
                # x: one (Cin, tm) slab per (batch, m-tile, tap)
                pl.BlockSpec((None, None, Cin, tm), lambda n, m, kk: (kk, n, 0, m)),
                # weights: (Cout, Cin) tap slice; constant along n, m -> stays resident
                pl.BlockSpec((None, Cout, Cin), lambda n, m, kk: (kk, 0, 0)),
                # bias column, resident
                pl.BlockSpec((Cout, 1), lambda n, m, kk: (0, 0)),
            ],
            # output block constant along kk -> accumulator pattern
            out_specs=pl.BlockSpec((None, Cout, tm), lambda n, m, kk: (n, 0, m)),
            scratch_shapes=[pltpu.VMEM((Cout, tm), jnp.float32)],
        ),
        compiler_params=pltpu.CompilerParams(
            dimension_semantics=("parallel", "parallel", "arbitrary"),
            vmem_limit_bytes=32 * 1024 * 1024,
        ),
    )(x_stack, w_stack, b_col)

    return out[:, :, :M]


def out_conv_forward(x_nchw, weight, bias, scaling=1):
    """Reproduces OutConv.forward:
         conv = Conv2d(Cin, Cout, kernel_size=scaling, padding=ceil((scaling-1)/2))
         return conv(x)[:, :, :H, :W] / scaling**2
       x_nchw: (N, Cin, H, W), weight: (Cout, Cin, K, K), bias: (Cout,)
    """
    N, Cin, H, W = x_nchw.shape
    Cout, _, K, _ = weight.shape
    P = math.ceil((K - 1) / 2)
    inv_scale2 = 1.0 / float(scaling) ** 2
    M = H * W

    if K == 1:
        # Fast path: pure reshape, no transposes / padding / im2col.
        x_stack = x_nchw.reshape(1, N, Cin, M)
    else:
        # General path: one shifted NCHW window per conv tap; the K*K taps are
        # reduced inside the kernel via the "arbitrary" grid axis.
        # TODO(synk): gather the shifted windows with manual DMA inside the
        # kernel to avoid this K^2-sized activation copy in HBM.
        x_pad = jnp.pad(x_nchw, ((0, 0), (0, 0), (P, P), (P, P)))
        slices = [
            x_pad[:, :, ky:ky + H, kx:kx + W].reshape(N, Cin, M)
            for ky in range(K)
            for kx in range(K)
        ]
        x_stack = jnp.stack(slices, axis=0)  # (K*K, N, Cin, M)

    # weight (Cout, Cin, K, K) -> (K*K, Cout, Cin), tap index = ky*K + kx,
    # pre-scaled by 1/scaling**2 (tiny one-time op; bias likewise).
    w_stack = (
        jnp.transpose(weight, (2, 3, 0, 1)).reshape(K * K, Cout, Cin) * inv_scale2
    ).astype(x_nchw.dtype)
    b_col = (bias * inv_scale2).reshape(Cout, 1).astype(jnp.float32)

    out = _conv_matmul(x_stack, w_stack, b_col, out_dtype=x_nchw.dtype)  # (N,Cout,M)
    return out.reshape(N, Cout, H, W)


if __name__ == "__main__":
    key = jax.random.PRNGKey(0)
    kx, kw, kb = jax.random.split(key, 3)

    N, Cin, H, W = 2, 4, 16, 16
    Cout, scaling = 3, 1
    K = scaling * 1

    x = jax.random.normal(kx, (N, Cin, H, W), dtype=jnp.float32)

    # Deterministic Conv2d-style init (kaiming-uniform-ish bounds).
    fan_in = Cin * K * K
    wbound = math.sqrt(1.0 / fan_in)
    weight = jax.random.uniform(
        kw, (Cout, Cin, K, K), dtype=jnp.float32, minval=-wbound, maxval=wbound
    )
    bias = jax.random.uniform(
        kb, (Cout,), dtype=jnp.float32, minval=-wbound, maxval=wbound
    )

    out = out_conv_forward(x, weight, bias, scaling)
    out = jax.block_until_ready(out)

    ref = jax.lax.conv_general_dilated(
        x, weight, window_strides=(1, 1),
        padding=[(math.ceil((K - 1) / 2),) * 2] * 2,
        dimension_numbers=("NCHW", "OIHW", "NCHW"),
    )[:, :, :H, :W] + bias.reshape(1, Cout, 1, 1)
    ref = ref / scaling ** 2

    assert out.shape == (N, Cout, H, W)
    assert jnp.allclose(out, ref, atol=1e-5, rtol=1e-5)

    # Also exercise the K>1 (scaling>1) reduction path.
    scaling2 = 3
    K2 = scaling2
    w2 = jax.random.uniform(
        kw, (Cout, Cin, K2, K2), dtype=jnp.float32, minval=-0.2, maxval=0.2
    )
    out2 = jax.block_until_ready(out_conv_forward(x, w2, bias, scaling2))
    ref2 = jax.lax.conv_general_dilated(
        x, w2, window_strides=(1, 1),
        padding=[(math.ceil((K2 - 1) / 2),) * 2] * 2,
        dimension_numbers=("NCHW", "OIHW", "NCHW"),
    )[:, :, :H, :W] + bias.reshape(1, Cout, 1, 1)
    ref2 = ref2 / scaling2 ** 2
    assert jnp.allclose(out2, ref2, atol=1e-4, rtol=1e-4)

    print("KERNEL_OK")
</pallas_src>

<mosaic_0001>
module attributes {stable_mosaic.version = 11 : i64} {
  func.func @_outconv_kernel(%arg0: i32, %arg1: i32, %arg2: i32, %arg3: memref<1x1x4x256xf32, #tpu.memory_space<vmem>>, %arg4: memref<1x3x4xf32, #tpu.memory_space<vmem>>, %arg5: memref<3x1xf32, #tpu.memory_space<vmem>>, %arg6: memref<1x3x256xf32, #tpu.memory_space<vmem>>, %arg7: memref<3x256xf32, #tpu.memory_space<vmem>>) attributes {dimension_semantics = [#tpu.dimension_semantics<parallel>, #tpu.dimension_semantics<parallel>, #tpu.dimension_semantics<arbitrary>], iteration_bounds = array<i64: 2, 1, 1>, scalar_prefetch = 0 : i64, scratch_operands = 1 : i64, tpu.core_type = #tpu.core_type<tc>, window_params = [{transform_indices = @transform_0, window_bounds = array<i64: 1, 1, 4, 256>}, {transform_indices = @transform_1, window_bounds = array<i64: 1, 3, 4>}, {pipeline_mode = #tpu.pipeline_mode<synchronous>, transform_indices = @transform_2, window_bounds = array<i64: 3, 1>}, {transform_indices = @transform_3, window_bounds = array<i64: 1, 3, 256>}]} {
    %c0_i32 = arith.constant 0 : i32
    %0 = arith.cmpi eq, %arg2, %c0_i32 : i32
    %1 = arith.extui %0 : i1 to i32
    %c0_i32_0 = arith.constant 0 : i32
    %2 = arith.cmpi ne, %1, %c0_i32_0 : i32
    scf.if %2 {
      %cst_13 = arith.constant 0.000000e+00 : f32
      %14 = vector.broadcast %cst_13 : f32 to vector<3x256xf32>
      %c0_14 = arith.constant 0 : index
      %c0_15 = arith.constant 0 : index
      %15 = vector.load %arg7[%c0_14, %c0_15] : memref<3x256xf32, #tpu.memory_space<vmem>>, vector<3x256xf32>
      tpu.vector_store %arg7[%c0_14, %c0_15], %14 {strides = array<i32>} : memref<3x256xf32, #tpu.memory_space<vmem>>, vector<3x256xf32>,
    } else {
    }
    %c0 = arith.constant 0 : index
    %c0_1 = arith.constant 0 : index
    %3 = vector.load %arg7[%c0, %c0_1] : memref<3x256xf32, #tpu.memory_space<vmem>>, vector<3x256xf32>
    %c0_2 = arith.constant 0 : index
    %c0_3 = arith.constant 0 : index
    %c0_4 = arith.constant 0 : index
    %4 = vector.load %arg4[%c0_2, %c0_3, %c0_4] : memref<1x3x4xf32, #tpu.memory_space<vmem>>, vector<1x3x4xf32>
    %5 = vector.shape_cast %4 : vector<1x3x4xf32> to vector<3x4xf32>
    %c0_5 = arith.constant 0 : index
    %c0_6 = arith.constant 0 : index
    %c0_7 = arith.constant 0 : index
    %c0_8 = arith.constant 0 : index
    %6 = vector.load %arg3[%c0_5, %c0_6, %c0_7, %c0_8] : memref<1x1x4x256xf32, #tpu.memory_space<vmem>>, vector<1x1x4x256xf32>
    %7 = vector.shape_cast %6 : vector<1x1x4x256xf32> to vector<4x256xf32>
    %cst = arith.constant dense<0.000000e+00> : vector<3x256xf32>
    %8 = tpu.matmul %5, %7, %cst {dimension_numbers = #tpu.dot_dimension_numbers<[1], [0], [0], [1], [0, 0, 1, 1], [], []>} : vector<3x4xf32>, vector<4x256xf32>, vector<3x256xf32> -> vector<3x256xf32>
    %9 = arith.addf %3, %8 : vector<3x256xf32>
    %c0_9 = arith.constant 0 : index
    %c0_10 = arith.constant 0 : index
    %10 = vector.load %arg7[%c0_9, %c0_10] : memref<3x256xf32, #tpu.memory_space<vmem>>, vector<3x256xf32>
    tpu.vector_store %arg7[%c0_9, %c0_10], %9 {strides = array<i32>} : memref<3x256xf32, #tpu.memory_space<vmem>>, vector<3x256xf32>,
    %c0_i32_11 = arith.constant 0 : i32
    %11 = arith.cmpi eq, %arg2, %c0_i32_11 : i32
    %12 = arith.extui %11 : i1 to i32
    %c0_i32_12 = arith.constant 0 : i32
    %13 = arith.cmpi ne, %12, %c0_i32_12 : i32
    scf.if %13 {
      %c0_13 = arith.constant 0 : index
      %c0_14 = arith.constant 0 : index
      %14 = vector.load %arg7[%c0_13, %c0_14] : memref<3x256xf32, #tpu.memory_space<vmem>>, vector<3x256xf32>
      %c0_15 = arith.constant 0 : index
      %c0_16 = arith.constant 0 : index
      %15 = vector.load %arg5[%c0_15, %c0_16] : memref<3x1xf32, #tpu.memory_space<vmem>>, vector<3x1xf32>
      %16 = vector.broadcast %15 : vector<3x1xf32> to vector<3x256xf32>
      %17 = arith.addf %14, %16 : vector<3x256xf32>
      %c0_17 = arith.constant 0 : index
      %c0_18 = arith.constant 0 : index
      %c0_19 = arith.constant 0 : index
      %18 = vector.load %arg6[%c0_17, %c0_18, %c0_19] : memref<1x3x256xf32, #tpu.memory_space<vmem>>, vector<1x3x256xf32>
      %19 = vector.shape_cast %18 : vector<1x3x256xf32> to vector<3x256xf32>
      %20 = vector.shape_cast %17 : vector<3x256xf32> to vector<1x3x256xf32>
      tpu.vector_store %arg6[%c0_17, %c0_18, %c0_19], %20 {strides = array<i32>} : memref<1x3x256xf32, #tpu.memory_space<vmem>>, vector<1x3x256xf32>,
    } else {
    }
    return
  }
  func.func @transform_0(%arg0: i32, %arg1: i32, %arg2: i32) -> (i32, i32, i32, i32) {
    %c0_i32 = arith.constant 0 : i32
    %c0_i32_0 = arith.constant 0 : i32
    return %arg2, %arg0, %c0_i32, %arg1 : i32, i32, i32, i32
  }
  func.func @transform_1(%arg0: i32, %arg1: i32, %arg2: i32) -> (i32, i32, i32) {
    %c0_i32 = arith.constant 0 : i32
    %c0_i32_0 = arith.constant 0 : i32
    %c0_i32_1 = arith.constant 0 : i32
    return %arg2, %c0_i32, %c0_i32_0 : i32, i32, i32
  }
  func.func @transform_2(%arg0: i32, %arg1: i32, %arg2: i32) -> (i32, i32) {
    %c0_i32 = arith.constant 0 : i32
    %c0_i32_0 = arith.constant 0 : i32
    %c0_i32_1 = arith.constant 0 : i32
    return %c0_i32, %c0_i32_0 : i32, i32
  }
  func.func @transform_3(%arg0: i32, %arg1: i32, %arg2: i32) -> (i32, i32, i32) {
    %c0_i32 = arith.constant 0 : i32
    %c0_i32_0 = arith.constant 0 : i32
    return %arg0, %c0_i32, %arg1 : i32, i32, i32
  }
}

</mosaic_0001>

<llo_original>
// kernel: tpu_custom_call.1
$region0: #{tpu_custom_call.1}
  #allocation0 [shape = 'u32[]', space=smem, size = 0x4, offset = 0x4, fixed_abs, tag = 'smem constant byte address 0x4 - core index']
  #allocation1 [shape = 'u32[72,128]{1,0:T(1,128)}', space=vmem, size = 0x9000, scoped, tag = 'internal scratch']
  #allocation2 [shape = 'f32[3,256]{1,0:T(4,128)}', space=vmem, size = 0x1000, scoped, tag = 'scratch operand']
  %s0 = inlined_call_operand.hbm [shape: f32[1,2,4,256], index: 0, kind: input, shape index: {}]
  %s1 = inlined_call_operand.vmem [shape: f32[1,3,4], index: 1, kind: input, shape index: {}]
  %s2 = inlined_call_operand.vmem [shape: f32[3,1], index: 2, kind: input, shape index: {}]
  %s3 = inlined_call_operand.vmem [shape: f32[2,3,256], index: 3, kind: output, shape index: {}]
  %s4 = sld [smem:[#allocation0]]
  $region57: #{tpu_custom_call.1} parent=0
    _
  %s6 = ssub.s32 1, %s4
  %s7 = scalar_select 0, %s6, %s4
  $region1: #{tpu_custom_call.1} parent=0
    #allocation3 [shape = 'u8[8192]{0}', space=vmem, size = 0x2000, scoped, tag = 'input window, operand 0']
    #allocation4 [shape = 's32[2]{0}', space=sflag, size = 0x8, scoped, tag = 'scoped memory for tpu_custom_call.1']
    %8 = vsyncpa [#allocation4], 0
    %s9 = scalar_lea.sflag [#allocation4], 1
    %10 = vsyncpa %s9, 0
    loop: start=0, step=1, limit=4
    $region2: #{tpu_custom_call.1} parent=1 // loop_pre_header
      _
    $region3: #{tpu_custom_call.1} parent=1 // loop_header
      %s12 = sphi 0, %s16
      %p13 = scmp.ge.s32.totalorder %s12, 4
      %s19 = sphi 0, %s38
      %s20 = sphi 0, %s34
      %s21 = sphi 0, %s30
      %s22 = sphi 0, %s19
      %s23 = sphi 0, %s20
      %s24 = sphi 0, %s21
      %s25 = sphi 0, %s22
      %s26 = sphi 0, %s23
      %s27 = sphi 0, %s24
      %s45 = sphi 0, %s47
      %s48 = sphi 0, %s45
      %s49 = sphi 0, %s48
      %s65 = sphi 0, %s49
      %s71 = sphi 0, %s73
      %s74 = sphi 0, %s71
      %s75 = sphi 0, %s74
      %s91 = sphi 0, %s75
      %s95 = sphi 0, %s95
      %s97 = sphi 0, %s95
      %s98 = sphi 0, %s97
      %s112 = sphi 0, %s98
      %s120 = sphi 0, %s122
      %s123 = sphi 0, %s120
      %s124 = sphi 0, %s123
      %s140 = sphi 0, %s124
    $region4: #{tpu_custom_call.1} parent=1 // loop_header_branch
      %15 = sbr.rel (%p13) target = $region8
    $region5: #{tpu_custom_call.1} parent=1 // loop_body
      %s17 = ssub.s32 %s12, 1
      %s18 = ssub.s32 %s12, 2
      %s28 = sadd.s32 1, %s21
      %p29 = scmp.ge.s32.totalorder %s28, 1
      %s30 = scalar_select %p29, 0, %s28
      %s31 = sadd.s32 1, %s20
      %s32 = scalar_select %p29, %s31, %s20
      %p33 = scmp.ge.s32.totalorder %s32, 1
      %s34 = scalar_select %p33, 0, %s32
      %s35 = sadd.s32 1, %s19
      %s36 = scalar_select %p33, %s35, %s19
      %p37 = scmp.ge.s32.totalorder %s36, 2
      %s38 = scalar_select %p37, 0, %s36
      %s39 = ssub.s32 %s21, %s30
      %s40 = ssub.s32 %s19, %s38
      %s41 = sor.u32 %s39, %s40
      %s42 = ssub.s32 %s20, %s34
      %s43 = sor.u32 %s41, %s42
      %p44 = scmp.eq.s32.totalorder %s43, 0
      %s46 = sadd.s32 %s45, 1
      %s47 = scalar_select %p44, %s45, %s46
      %p50 = pneg %p44
      %p51 = scmp.eq.s32.totalorder %s12, 1
      %p52 = por %p50, %p51
      %p53 = scmp.ne.s32.totalorder %s45, %s48
      %p54 = scmp.eq.s32.totalorder %s12, 0
      %p55 = por %p53, %p54
      %p56 = scmp.ne.s32.totalorder %s45, %s48
      %p57 = scmp.eq.s32.totalorder %s17, 1
      %p58 = por %p56, %p57
      %p59 = scmp.ne.s32.totalorder %s48, %s49
      %p60 = scmp.eq.s32.totalorder %s17, 0
      %p61 = por %p59, %p60
      %p62 = scmp.ne.s32.totalorder %s48, %s49
      %p63 = scmp.eq.s32.totalorder %s18, 1
      %p64 = por %p62, %p63
      %p66 = scmp.ne.s32.totalorder %s49, %s65
      %p67 = scmp.eq.s32.totalorder %s18, 0
      %p68 = por %p66, %p67
      %s69 = ssub.s32 %s21, %s30
      %p70 = scmp.eq.s32.totalorder %s69, 0
      %s72 = sadd.s32 %s71, 1
      %s73 = scalar_select %p70, %s71, %s72
      %p76 = pneg %p70
      %p77 = scmp.eq.s32.totalorder %s12, 1
      %p78 = por %p76, %p77
      %p79 = scmp.ne.s32.totalorder %s71, %s74
      %p80 = scmp.eq.s32.totalorder %s12, 0
      %p81 = por %p79, %p80
      %p82 = scmp.ne.s32.totalorder %s71, %s74
      %p83 = scmp.eq.s32.totalorder %s17, 1
      %p84 = por %p82, %p83
      %p85 = scmp.ne.s32.totalorder %s74, %s75
      %p86 = scmp.eq.s32.totalorder %s17, 0
      %p87 = por %p85, %p86
      %p88 = scmp.ne.s32.totalorder %s74, %s75
      %p89 = scmp.eq.s32.totalorder %s18, 1
      %p90 = por %p88, %p89
      %p92 = scmp.ne.s32.totalorder %s75, %s91
      %p93 = scmp.eq.s32.totalorder %s18, 0
      %p94 = por %p92, %p93
      %s96 = sadd.s32 %s95, 1
      %p99 = scmp.eq.s32.totalorder %s12, 1
      %p100 = scmp.ne.s32.totalorder %s95, %s97
      %p101 = scmp.eq.s32.totalorder %s12, 0
      %p102 = por %p100, %p101
      %p103 = scmp.ne.s32.totalorder %s95, %s97
      %p104 = scmp.eq.s32.totalorder %s17, 1
      %p105 = por %p103, %p104
      %p106 = scmp.ne.s32.totalorder %s97, %s98
      %p107 = scmp.eq.s32.totalorder %s17, 0
      %p108 = por %p106, %p107
      %p109 = scmp.ne.s32.totalorder %s97, %s98
      %p110 = scmp.eq.s32.totalorder %s18, 1
      %p111 = por %p109, %p110
      %p113 = scmp.ne.s32.totalorder %s98, %s112
      %p114 = scmp.eq.s32.totalorder %s18, 0
      %p115 = por %p113, %p114
      %s116 = ssub.s32 %s19, %s38
      %s117 = ssub.s32 %s20, %s34
      %s118 = sor.u32 %s116, %s117
      %p119 = scmp.eq.s32.totalorder %s118, 0
      %s121 = sadd.s32 %s120, 1
      %s122 = scalar_select %p119, %s120, %s121
      %p125 = pneg %p119
      %p126 = scmp.eq.s32.totalorder %s12, 1
      %p127 = por %p125, %p126
      %p128 = scmp.ne.s32.totalorder %s120, %s123
      %p129 = scmp.eq.s32.totalorder %s12, 0
      %p130 = por %p128, %p129
      %p131 = scmp.ne.s32.totalorder %s120, %s123
      %p132 = scmp.eq.s32.totalorder %s17, 1
      %p133 = por %p131, %p132
      %p134 = scmp.ne.s32.totalorder %s123, %s124
      %p135 = scmp.eq.s32.totalorder %s17, 0
      %p136 = por %p134, %p135
      %p137 = scmp.ne.s32.totalorder %s123, %s124
      %p138 = scmp.eq.s32.totalorder %s18, 1
      %p139 = por %p137, %p138
      %p141 = scmp.ne.s32.totalorder %s124, %s140
      %p142 = scmp.eq.s32.totalorder %s18, 0
      %p143 = por %p141, %p142
      %p144 = scmp.le.s32.totalorder 1, %s12
      %p145 = scmp.lt.s32.totalorder %s12, 3
      %p146 = pnand %p144, %p145
      %p147 = pneg %p146
      // Predicated region
      $region9: #{tpu_custom_call.1} parent=5 // pred_check
        _
      $region10: #{tpu_custom_call.1} parent=5 // pred_check_branch
        %149 = sbr.rel (%p146) target = $region12
      $region11: #{tpu_custom_call.1} parent=5 // pred_region
        %s150 = ssub.s32 %s12, 1
        // Predicated region
        $region13: #{tpu_custom_call.1} parent=11 // pred_check
          %p151 = pneg %p87
        $region14: #{tpu_custom_call.1} parent=11 // pred_check_branch
          %153 = sbr.rel (%p151) target = $region16
        $region15: #{tpu_custom_call.1} parent=11 // pred_region
          %p154 = scmp.lt.s32.totalorder %s24, 0
          %s155 = scalar_select %p154, %s24, 0
          %s156 = smul.addr %s155, 4
          %s157 = scalar_lea.vmem %s1, %s156
        $region16: #{tpu_custom_call.1} parent=11 // pred_fallthru
          _
        // Predicated region
        $region17: #{tpu_custom_call.1} parent=11 // pred_check
          %p158 = pneg %p108
        $region18: #{tpu_custom_call.1} parent=11 // pred_check_branch
          %160 = sbr.rel (%p158) target = $region20
        $region19: #{tpu_custom_call.1} parent=11 // pred_region
          _
        $region20: #{tpu_custom_call.1} parent=11 // pred_fallthru
          _
      $region12: #{tpu_custom_call.1} parent=5 // pred_fallthru
        _
      %p161 = scmp.lt.s32.totalorder %s12, 2
      // Predicated region
      $region21: #{tpu_custom_call.1} parent=5 // pred_check
        %p162 = pneg %p161
      $region22: #{tpu_custom_call.1} parent=5 // pred_check_branch
        %164 = sbr.rel (%p162) target = $region24
      $region23: #{tpu_custom_call.1} parent=5 // pred_region
        // Predicated region
        $region25: #{tpu_custom_call.1} parent=23 // pred_check
          %p165 = pneg %p55
        $region26: #{tpu_custom_call.1} parent=23 // pred_check_branch
          %167 = sbr.rel (%p165) target = $region28
        $region27: #{tpu_custom_call.1} parent=23 // pred_region
          %s168 = sand.u32 %s45, 1
          %s169 = scalar_lea.sflag [#allocation4], %s168
          %s170 = sand.u32 %s45, 1
          %s171 = smul.addr %s170, 8
          %s172 = scalar_lea.vmem [#allocation3], %s171
          %s173 = smul.u32 2, %s20
          %175 = vsyncadd %s169, 0
          %s176 = smul.addr %s19, 2
          %s177 = sadd.s32 %s173, %s176
          %s178 = smul.addr %s21, 4
          %s179 = sadd.s32 %s177, %s178
          %s180 = smul.addr %s179, 4
          %s181 = scalar_lea.hbm %s0, %s180
          %s183 = sshll.u32 %s181, 4
          %s184 = int_to_ptr.hbm [resolvable:$true] %s183
          %s185 = sshll.u32 %s172, 4
          %s186 = int_to_ptr.vmem [resolvable:$true] %s185
          %188 = dma.hbm_to_vmem [thread:$0]  %s184, 128, %s186, %s169
        $region28: #{tpu_custom_call.1} parent=23 // pred_fallthru
          _
      $region24: #{tpu_custom_call.1} parent=5 // pred_fallthru
        _
      %p189 = scmp.le.s32.totalorder 1, %s12
      %p190 = scmp.lt.s32.totalorder %s12, 3
      %p191 = pnand %p189, %p190
      %p192 = pneg %p191
      // Predicated region
      $region29: #{tpu_custom_call.1} parent=5 // pred_check
        _
      $region30: #{tpu_custom_call.1} parent=5 // pred_check_branch
        %194 = sbr.rel (%p191) target = $region32
      $region31: #{tpu_custom_call.1} parent=5 // pred_region
        %s195 = ssub.s32 %s12, 1
        %s196 = sand.u32 %s48, 1
        %s197 = scalar_lea.sflag [#allocation4], %s196
        %s198 = sand.u32 %s48, 1
        %s199 = smul.addr %s198, 8
        %s200 = scalar_lea.vmem [#allocation3], %s199
        // Predicated region
        $region33: #{tpu_custom_call.1} parent=31 // pred_check
          %p201 = pneg %p61
        $region34: #{tpu_custom_call.1} parent=31 // pred_check_branch
          %203 = sbr.rel (%p201) target = $region36
        $region35: #{tpu_custom_call.1} parent=31 // pred_region
          %205 = dma.done %s197, 128
        $region36: #{tpu_custom_call.1} parent=31 // pred_fallthru
          _
        %s206 = sand.u32 %s48, 1
        %s207 = scalar_lea.sflag [#allocation4], %s206
        %s208 = sand.u32 %s48, 1
        %s209 = smul.addr %s208, 8
        %s210 = scalar_lea.vmem [#allocation3], %s209
        %p211 = pneg %p61
        %p212 = pneg %p58
        %p213 = scmp.lt.s32.totalorder %s24, 0
        %s214 = scalar_select %p213, %s24, 0
        %s215 = smul.addr %s214, 4
        %s216 = scalar_lea.vmem %s1, %s215
        %p217 = pneg %p87
        %p218 = pneg %p84
        %p219 = pneg %p108
        %p220 = pneg %p105
        %p221 = pneg %p136
        %p222 = pneg %p133
        %s223 = smul.u32 2, %s23
        %p224 = scmp.lt.s32.totalorder %s22, 1
        %s225 = scalar_select %p224, %s22, 1
        %p226 = scmp.lt.s32.totalorder %s223, 1
        %s227 = scalar_select %p226, %s223, 1
        %s228 = smul.addr %s225, 2
        %s229 = sadd.s32 %s227, %s228
        %s230 = smul.addr %s229, 4
        %s231 = scalar_lea.vmem %s3, %s230
        %s232 = smul.u32 2, %s23
        %p233 = scmp.lt.s32.totalorder %s24, 0
        %s234 = scalar_select %p233, %s24, 0
        %s235 = smul.addr %s234, 4
        %s236 = scalar_lea.vmem %s1, %s235
        %s237 = smul.u32 2, %s23
        %p238 = scmp.lt.s32.totalorder %s22, 1
        %s239 = scalar_select %p238, %s22, 1
        %p240 = scmp.lt.s32.totalorder %s237, 1
        %s241 = scalar_select %p240, %s237, 1
        %s242 = smul.addr %s239, 2
        %s243 = sadd.s32 %s241, %s242
        %s244 = smul.addr %s243, 4
        %s245 = scalar_lea.vmem %s3, %s244
        %s246 = smul.u32 2, %s23
        %p247 = scmp.eq.s32.totalorder %s24, 0
        // Predicated region
        $region37: #{tpu_custom_call.1} parent=31 // pred_check
          %p248 = pneg %p247
        $region38: #{tpu_custom_call.1} parent=31 // pred_check_branch
          %250 = sbr.rel (%p248) target = $region40
        $region39: #{tpu_custom_call.1} parent=31 // pred_region
          %251 = vst [vmem:[#allocation2] sm:$0x77] 0.0
        $region40: #{tpu_custom_call.1} parent=31 // pred_fallthru
          _
        %v252 = vld [vmem:[#allocation2] sm:$0x77]
        %v253 = vld [vmem:[%s236] sm:$0x7]
        %v254 = vld [vmem:[%s200] sm:$0xff]
        %256 = vst [vmem:[#allocation1] ss:$2 sm:$0xff] %v254
        %v257 = vld.sshfl [vmem:[#allocation1] sm:$0xff pattern:$0x75316420]
        %v258 = vld.sshfl [vmem:[#allocation1 + $0x8] sm:$0xff pattern:$0x75316420]
        %vm259 = vcmask 31744
        %v261 = vsel %vm259, %v253, 0
        %vm263 = vcmask 1043456
        %v264 = vsel %vm263, %v257, 0
        %v266 = vsel %vm263, %v258, 0
        %268 = vmatpush.msra.mxu0 0.0
        %269 = vmatpush.msra.mxu0 0.0
        %270 = vmatpush.msra.mxu0 0.0
        %271 = vmatpush.msra.mxu0 0.0
        %272 = vmatpush.msra.mxu0 0.0
        %273 = vmatpush.msra.mxu0 0.0
        %274 = vmatpush.msra.mxu0 0.0
        %275 = vmatpush.msra.mxu0 0.0
        %276 = vmatpush.msra.mxu0 0.0
        %277 = vmatpush.msra.mxu0 0.0
        %278 = vmatpush.msra.mxu0 0.0
        %279 = vmatpush.msra.mxu0 0.0
        %280 = vmatpush.msra.mxu0 0.0
        %281 = vmatpush.msra.mxu0 0.0
        %282 = vmatpush.msra.mxu0 0.0
        %283 = vmatpush.msra.mxu0 %v264
        %284 = vmatmul.f32.gmra.mxu0 %v261
        %v285 = vpop.f32.mrf.mxu0
        %v286 = vadd.f32 0.0, %v285
        %287 = vdwg.mxu0
        %288 = vmatpush.msra.mxu0 0.0
        %289 = vmatpush.msra.mxu0 0.0
        %290 = vmatpush.msra.mxu0 0.0
        %291 = vmatpush.msra.mxu0 0.0
        %292 = vmatpush.msra.mxu0 0.0
        %293 = vmatpush.msra.mxu0 0.0
        %294 = vmatpush.msra.mxu0 0.0
        %295 = vmatpush.msra.mxu0 0.0
        %296 = vmatpush.msra.mxu0 0.0
        %297 = vmatpush.msra.mxu0 0.0
        %298 = vmatpush.msra.mxu0 0.0
        %299 = vmatpush.msra.mxu0 0.0
        %300 = vmatpush.msra.mxu0 0.0
        %301 = vmatpush.msra.mxu0 0.0
        %302 = vmatpush.msra.mxu0 0.0
        %303 = vmatpush.msra.mxu0 %v266
        %304 = vmatmul.f32.gmra.mxu0 %v261
        %v305 = vpop.f32.mrf.mxu0
        %v306 = vadd.f32 0.0, %v305
        %307 = vdwg.mxu0
        %v310 = vrot.slane %v306, 4
        %v311 = vsel %vm263, %v286, %v310
        %v313 = vadd.f32 %v252, %v311
        %314 = vst [vmem:[#allocation2] sm:$0x77] %v313
        // Predicated region
        $region41: #{tpu_custom_call.1} parent=31 // pred_check
          %p315 = pneg %p247
        $region42: #{tpu_custom_call.1} parent=31 // pred_check_branch
          %317 = sbr.rel (%p315) target = $region44
        $region43: #{tpu_custom_call.1} parent=31 // pred_region
          %v318 = vld [vmem:[#allocation2] sm:$0x77]
          %v319 = vld [vmem:[%s2] sm:$0x7]
          %321 = vset.pattern.permute.xlu0 0
          %322 = vperm.xlu0 %321, %v319
          %v323 = vpop.permute.xlu0 %322
          %v325 = vunpack.c.l.s4 839922192
          %v326 = vunpack.c.0.s8 %v325
          %v327 = vperm.slane %v323, %v326
          %v329 = vadd.f32 %v318, %v327
          %330 = vst [vmem:[%s245] sm:$0x77] %v329
        $region44: #{tpu_custom_call.1} parent=31 // pred_fallthru
          _
        %s331 = smul.u32 2, %s23
        %p332 = scmp.lt.s32.totalorder %s22, 1
        %s333 = scalar_select %p332, %s22, 1
        %p334 = scmp.lt.s32.totalorder %s331, 1
        %s335 = scalar_select %p334, %s331, 1
        %s336 = smul.addr %s333, 2
        %s337 = sadd.s32 %s335, %s336
        %s338 = smul.addr %s337, 4
        %s339 = scalar_lea.vmem %s3, %s338
        // Predicated region
        $region45: #{tpu_custom_call.1} parent=31 // pred_check
          %p340 = pneg %p133
        $region46: #{tpu_custom_call.1} parent=31 // pred_check_branch
          %342 = sbr.rel (%p340) target = $region48
        $region47: #{tpu_custom_call.1} parent=31 // pred_region
          %s343 = smul.u32 2, %s23
        $region48: #{tpu_custom_call.1} parent=31 // pred_fallthru
          _
      $region32: #{tpu_custom_call.1} parent=5 // pred_fallthru
        _
      %p344 = scmp.le.s32.totalorder 2, %s12
      // Predicated region
      $region49: #{tpu_custom_call.1} parent=5 // pred_check
        %p345 = pneg %p344
      $region50: #{tpu_custom_call.1} parent=5 // pred_check_branch
        %347 = sbr.rel (%p345) target = $region52
      $region51: #{tpu_custom_call.1} parent=5 // pred_region
        %s348 = ssub.s32 %s12, 2
        // Predicated region
        $region53: #{tpu_custom_call.1} parent=51 // pred_check
          %p349 = pneg %p139
        $region54: #{tpu_custom_call.1} parent=51 // pred_check_branch
          %351 = sbr.rel (%p349) target = $region56
        $region55: #{tpu_custom_call.1} parent=51 // pred_region
          %s352 = smul.u32 2, %s26
          %p353 = scmp.lt.s32.totalorder %s25, 1
          %s354 = scalar_select %p353, %s25, 1
          %p355 = scmp.lt.s32.totalorder %s352, 1
          %s356 = scalar_select %p355, %s352, 1
          %s357 = smul.addr %s354, 2
          %s358 = sadd.s32 %s356, %s357
          %s359 = smul.addr %s358, 4
          %s360 = scalar_lea.vmem %s3, %s359
        $region56: #{tpu_custom_call.1} parent=51 // pred_fallthru
          _
      $region52: #{tpu_custom_call.1} parent=5 // pred_fallthru
        _
    $region6: #{tpu_custom_call.1} parent=1 // loop_footer
      %s16 = sadd.s32 1, %s12
    $region7: #{tpu_custom_call.1} parent=1 // loop_footer_branch
      %11 = sbr.rel target = $region3
    $region8: #{tpu_custom_call.1} parent=1 // loop_exit
      _
    %361 = vsyncpa [#allocation4], 1
    %s362 = scalar_lea.sflag [#allocation4], 1
    %363 = vsyncpa %s362, 1

</llo_original>
